<compile_context>
chip_gen: v7x
topology: tpu7x:2x2x1
jax: 0.10.0
libtpu: 0.0.40
codegen_flags: <defaults>
</compile_context>

<pallas_src>
import functools

import jax
import jax.numpy as jnp
from jax import lax
from jax.experimental import pallas as pl
from jax.experimental.pallas import tpu as pltpu

LANES = 128            # TPU vreg lane width
MAX_TILE_ROWS = 4096   # (4096, 128) int32 = 2 MiB per input per pipeline buffer
CHUNK_ROWS = 512       # in-kernel chunking keeps intermediates vreg-resident


def _round_up(x, m):
    return (x + m - 1) // m * m


@functools.lru_cache(maxsize=None)
def _num_tensorcores_per_chip():
    """Best-effort TensorCores per chip: 2 on v4/v5p/v7x, 1 on v5e/v6e."""
    try:
        kind = jax.devices()[0].device_kind.lower()
    except Exception:
        return 1
    if "lite" in kind or "v5e" in kind or "v6" in kind:
        return 1
    if "v7" in kind or "v5p" in kind or "v4" in kind:
        # TODO(synk): on v7x, verify the 'parallel' grid axis really shards across both
        # TensorCores (otherwise switch the leading axis to pltpu.CORE_PARALLEL).
        return 2
    return 1


def _sensitivity_kernel(yhat_ref, y_ref, rel_ref, tp_ref, *, num_categories,
                        rows_valid, tiles_per_part, tile_rows, chunk_rows,
                        num_chunks, needs_mask):
    """Accumulate per-category relevant / true-positive counts for one tile.

    yhat_ref, y_ref : (tile_rows, 128) integer label tiles (lane-dense).
    rel_ref, tp_ref : (c_pad, 128) int32 accumulators; row c = category c.  Their block
                      index depends only on the parallel axis, so they stay resident
                      across the inner 'arbitrary' tile axis (accumulator pattern).
    """
    p = pl.program_id(0)
    t = pl.program_id(1)

    @pl.when(t == 0)
    def _():
        rel_ref[...] = jnp.zeros_like(rel_ref)
        tp_ref[...] = jnp.zeros_like(tp_ref)

    # Logical (unclamped) first row of this tile -- used only for the validity mask.
    base_row = (p * tiles_per_part + t) * tile_rows

    # Packed counting: low 16 bits count 'relevant' (y == c), high 16 bits count
    # 'true positive' (y == c and yhat == y).  Per-lane per-tile counts are
    # <= tile_rows < 2^16, so the two halves never interact.
    pack_both = jnp.int32(0x00010001)
    pack_rel = jnp.int32(0x00000001)

    def chunk_body(i, accs):
        r0 = pl.multiple_of(i * chunk_rows, chunk_rows)
        yh = yhat_ref[pl.ds(r0, chunk_rows), :]
        yy = y_ref[pl.ds(r0, chunk_rows), :]
        packed = jnp.where(yh == yy, pack_both, pack_rel)    # match hoisted out of C-loop
        if needs_mask:
            local = lax.broadcasted_iota(jnp.int32, (chunk_rows, 1), 0)
            valid = (base_row + r0 + local) < rows_valid
            packed = jnp.where(valid, packed, 0)
        new_accs = []
        for c in range(num_categories):
            sel = jnp.where(yy == c, packed, 0)
            new_accs.append(accs[c] + jnp.sum(sel, axis=0, keepdims=True))
        return tuple(new_accs)

    init = tuple(jnp.zeros((1, LANES), jnp.int32) for _ in range(num_categories))
    accs = lax.fori_loop(0, num_chunks, chunk_body, init,
                         unroll=2 if num_chunks > 1 else 1)

    # Unpack and accumulate with one static row store per category.
    for c in range(num_categories):
        lane = accs[c]                                       # (1, 128) packed counts
        rel_ref[c:c + 1, :] += lane & 0xFFFF
        tp_ref[c:c + 1, :] += lane >> 16


@functools.partial(jax.jit, static_argnums=(2,))
def get_sensitivities(yhat, y, num_categories):
    """One-vs-all sensitivity per category.  Returns (num_categories,) float32."""
    if num_categories <= 0:
        return jnp.zeros((0,), jnp.float32)

    def _prep(x):
        x = jnp.reshape(x, (-1,))
        if not jnp.issubdtype(x.dtype, jnp.signedinteger):
            x = x.astype(jnp.int32)
        return x

    yhat_flat = _prep(yhat)
    y_flat = _prep(y)
    n = yhat_flat.shape[0]
    if n == 0:
        return jnp.zeros((num_categories,), jnp.float32)

    rows_valid = pl.cdiv(n, LANES)
    rem = n % LANES
    if rem:
        # TODO(synk): this pad still copies both arrays in XLA; it is only hit when the
        # flattened label count isn't a multiple of 128 (rare for image/seq labels).
        pad = LANES - rem
        yhat_flat = jnp.pad(yhat_flat, (0, pad), constant_values=-1)
        y_flat = jnp.pad(y_flat, (0, pad), constant_values=-1)
    yhat2d = yhat_flat.reshape(rows_valid, LANES)            # free (bitcast) reshape
    y2d = y_flat.reshape(rows_valid, LANES)

    if rows_valid <= CHUNK_ROWS:
        chunk_rows = rows_valid        # block == full array: no partial blocks at all
        tile_rows = rows_valid
    else:
        chunk_rows = CHUNK_ROWS
        tile_rows = min(MAX_TILE_ROWS, (rows_valid // CHUNK_ROWS) * CHUNK_ROWS)
    num_chunks = tile_rows // chunk_rows
    tiles_total = pl.cdiv(rows_valid, tile_rows)

    num_partials = max(1, min(_num_tensorcores_per_chip(), tiles_total))
    tiles_per_part = pl.cdiv(tiles_total, num_partials)
    covered_rows = num_partials * tiles_per_part * tile_rows
    needs_mask = covered_rows > rows_valid    # ragged / duplicated tiles exist

    c_pad = _round_up(num_categories, 8)

    def in_map(p, t):
        # Clamp so no grid step DMAs a fully out-of-range block; logically out-of-range
        # rows are zeroed by the in-kernel row mask.
        return (jnp.minimum(p * tiles_per_part + t, tiles_total - 1), 0)

    def out_map(p, t):
        return (p, 0)

    kernel = functools.partial(
        _sensitivity_kernel,
        num_categories=num_categories, rows_valid=rows_valid,
        tiles_per_part=tiles_per_part, tile_rows=tile_rows,
        chunk_rows=chunk_rows, num_chunks=num_chunks, needs_mask=needs_mask)

    rel_counts, tp_counts = pl.pallas_call(
        kernel,
        out_shape=(
            jax.ShapeDtypeStruct((num_partials * c_pad, LANES), jnp.int32),
            jax.ShapeDtypeStruct((num_partials * c_pad, LANES), jnp.int32),
        ),
        grid=(num_partials, tiles_per_part),
        in_specs=[
            pl.BlockSpec((tile_rows, LANES), in_map),
            pl.BlockSpec((tile_rows, LANES), in_map),
        ],
        out_specs=(
            pl.BlockSpec((c_pad, LANES), out_map),
            pl.BlockSpec((c_pad, LANES), out_map),
        ),
        compiler_params=pltpu.CompilerParams(
            dimension_semantics=("parallel", "arbitrary")),
    )(yhat2d, y2d)

    # Tiny combine (per-core partials + lanes) and guarded divide in plain JAX.
    # NOTE: int32-exact up to ~2^31 total labels; cast partials to int64 (x64 enabled)
    # before this sum if inputs can exceed that.
    rel_per_cat = (rel_counts.reshape(num_partials, c_pad, LANES)
                   [:, :num_categories, :].sum(axis=(0, 2)))
    tp_per_cat = (tp_counts.reshape(num_partials, c_pad, LANES)
                  [:, :num_categories, :].sum(axis=(0, 2)))

    rel_f = rel_per_cat.astype(jnp.float32)
    tp_f = tp_per_cat.astype(jnp.float32)
    # sensitivity = tp / rel, 0 when there are no relevant elements (matches the
    # PyTorch `if torch.sum(relevantElements) == 0: 0` branch).
    return jnp.where(rel_per_cat == 0, 0.0, tp_f / jnp.maximum(rel_f, 1.0))


def _reference(yhat, y, num_categories):
    """Plain-JAX reference with the same semantics as the PyTorch module."""
    yh_f = jnp.reshape(yhat, (-1,))
    y_f = jnp.reshape(y, (-1,))
    out = []
    for c in range(num_categories):
        rel = (y_f == c)
        tp = (yh_f == c) & rel
        rel_s = int(jnp.sum(rel))
        out.append(0.0 if rel_s == 0 else float(jnp.sum(tp)) / rel_s)
    return jnp.asarray(out, dtype=jnp.float32)


if __name__ == "__main__":
    key = jax.random.PRNGKey(0)
    num_categories = 5

    # Case 1: per-pixel labels of a small batch (n % 128 == 0 -> zero-copy path).
    # Case 2: ragged flat size (n % 128 != 0 -> sentinel-padded last row).
    # Case 3: large enough to exercise multi-chunk tiles + in-kernel row mask.
    shapes = [(2, 4, 16, 16), (7, 37), (1100, 128)]
    for idx, shape in enumerate(shapes):
        k1, k2 = jax.random.split(jax.random.fold_in(key, idx))
        yhat = jax.random.randint(k1, shape, 0, num_categories, dtype=jnp.int32)
        y = jax.random.randint(k2, shape, 0, num_categories, dtype=jnp.int32)

        sens = jax.block_until_ready(get_sensitivities(yhat, y, num_categories))
        ref = _reference(yhat, y, num_categories)
        assert sens.shape == (num_categories,), (shape, sens.shape)
        assert jnp.allclose(sens, ref, atol=1e-6), (shape, sens, ref)

    # The PyTorch forward returns a Python list of floats:
    category_sensitivities = [float(s) for s in sens]
    assert len(category_sensitivities) == num_categories

    print("KERNEL_OK")
</pallas_src>

<mosaic_0001>
module attributes {stable_mosaic.version = 11 : i64} {
  func.func @_sensitivity_kernel(%arg0: i32, %arg1: i32, %arg2: memref<16x128xi32, #tpu.memory_space<vmem>>, %arg3: memref<16x128xi32, #tpu.memory_space<vmem>>, %arg4: memref<8x128xi32, #tpu.memory_space<vmem>>, %arg5: memref<8x128xi32, #tpu.memory_space<vmem>>) attributes {dimension_semantics = [#tpu.dimension_semantics<parallel>, #tpu.dimension_semantics<arbitrary>], iteration_bounds = array<i64: 1, 1>, scalar_prefetch = 0 : i64, scratch_operands = 0 : i64, tpu.core_type = #tpu.core_type<tc>, window_params = [{transform_indices = @transform_0, window_bounds = array<i64: 16, 128>}, {transform_indices = @transform_1, window_bounds = array<i64: 16, 128>}, {transform_indices = @transform_2, window_bounds = array<i64: 8, 128>}, {transform_indices = @transform_3, window_bounds = array<i64: 8, 128>}]} {
    %c0_i32 = arith.constant 0 : i32
    %0 = arith.cmpi eq, %arg1, %c0_i32 : i32
    %1 = arith.extui %0 : i1 to i32
    %c0_i32_0 = arith.constant 0 : i32
    %2 = arith.cmpi ne, %1, %c0_i32_0 : i32
    scf.if %2 {
      %c0_i32_65 = arith.constant 0 : i32
      %103 = vector.broadcast %c0_i32_65 : i32 to vector<8x128xi32>
      %c0_66 = arith.constant 0 : index
      %c0_67 = arith.constant 0 : index
      %104 = vector.load %arg4[%c0_66, %c0_67] : memref<8x128xi32, #tpu.memory_space<vmem>>, vector<8x128xi32>
      tpu.vector_store %arg4[%c0_66, %c0_67], %103 {strides = array<i32>} : memref<8x128xi32, #tpu.memory_space<vmem>>, vector<8x128xi32>,
      %c0_i32_68 = arith.constant 0 : i32
      %105 = vector.broadcast %c0_i32_68 : i32 to vector<8x128xi32>
      %c0_69 = arith.constant 0 : index
      %c0_70 = arith.constant 0 : index
      %106 = vector.load %arg5[%c0_69, %c0_70] : memref<8x128xi32, #tpu.memory_space<vmem>>, vector<8x128xi32>
      tpu.vector_store %arg5[%c0_69, %c0_70], %105 {strides = array<i32>} : memref<8x128xi32, #tpu.memory_space<vmem>>, vector<8x128xi32>,
    } else {
    }
    %c0_i32_1 = arith.constant 0 : i32
    %3 = vector.broadcast %c0_i32_1 : i32 to vector<1x128xi32>
    %c0_i32_2 = arith.constant 0 : i32
    %4 = vector.broadcast %c0_i32_2 : i32 to vector<1x128xi32>
    %c0_i32_3 = arith.constant 0 : i32
    %5 = vector.broadcast %c0_i32_3 : i32 to vector<1x128xi32>
    %c0_i32_4 = arith.constant 0 : i32
    %6 = vector.broadcast %c0_i32_4 : i32 to vector<1x128xi32>
    %c0_i32_5 = arith.constant 0 : i32
    %7 = vector.broadcast %c0_i32_5 : i32 to vector<1x128xi32>
    %c65537_i32 = arith.constant 65537 : i32
    %c1_i32 = arith.constant 1 : i32
    %c0_i32_6 = arith.constant 0 : i32
    %c16_i32 = arith.constant 16 : i32
    %8 = arith.muli %c0_i32_6, %c16_i32 : i32
    %9 = tpu.assume_multiple %8, 16 : i32
    %10 = arith.index_cast %9 : i32 to index
    %c0 = arith.constant 0 : index
    %11 = vector.load %arg2[%10, %c0] : memref<16x128xi32, #tpu.memory_space<vmem>>, vector<16x128xi32>
    %12 = arith.index_cast %9 : i32 to index
    %c0_7 = arith.constant 0 : index
    %13 = vector.load %arg3[%12, %c0_7] : memref<16x128xi32, #tpu.memory_space<vmem>>, vector<16x128xi32>
    %14 = arith.cmpi eq, %11, %13 : vector<16x128xi32>
    %15 = vector.broadcast %c65537_i32 : i32 to vector<16x128xi32>
    %16 = vector.broadcast %c1_i32 : i32 to vector<16x128xi32>
    %17 = arith.select %14, %15, %16 : vector<16x128xi1>, vector<16x128xi32>
    %c0_i32_8 = arith.constant 0 : i32
    %18 = vector.broadcast %c0_i32_8 : i32 to vector<16x128xi32>
    %19 = arith.cmpi eq, %13, %18 : vector<16x128xi32>
    %c0_i32_9 = arith.constant 0 : i32
    %20 = vector.broadcast %c0_i32_9 : i32 to vector<16x128xi32>
    %21 = arith.select %19, %17, %20 : vector<16x128xi1>, vector<16x128xi32>
    %cst = arith.constant dense<0> : vector<128xi32>
    %22 = vector.multi_reduction <add>, %21, %cst [0] : vector<16x128xi32> to vector<128xi32>
    %23 = vector.shape_cast %22 : vector<128xi32> to vector<1x128xi32>
    %24 = arith.addi %3, %23 : vector<1x128xi32>
    %c1_i32_10 = arith.constant 1 : i32
    %25 = vector.broadcast %c1_i32_10 : i32 to vector<16x128xi32>
    %26 = arith.cmpi eq, %13, %25 : vector<16x128xi32>
    %c0_i32_11 = arith.constant 0 : i32
    %27 = vector.broadcast %c0_i32_11 : i32 to vector<16x128xi32>
    %28 = arith.select %26, %17, %27 : vector<16x128xi1>, vector<16x128xi32>
    %cst_12 = arith.constant dense<0> : vector<128xi32>
    %29 = vector.multi_reduction <add>, %28, %cst_12 [0] : vector<16x128xi32> to vector<128xi32>
    %30 = vector.shape_cast %29 : vector<128xi32> to vector<1x128xi32>
    %31 = arith.addi %4, %30 : vector<1x128xi32>
    %c2_i32 = arith.constant 2 : i32
    %32 = vector.broadcast %c2_i32 : i32 to vector<16x128xi32>
    %33 = arith.cmpi eq, %13, %32 : vector<16x128xi32>
    %c0_i32_13 = arith.constant 0 : i32
    %34 = vector.broadcast %c0_i32_13 : i32 to vector<16x128xi32>
    %35 = arith.select %33, %17, %34 : vector<16x128xi1>, vector<16x128xi32>
    %cst_14 = arith.constant dense<0> : vector<128xi32>
    %36 = vector.multi_reduction <add>, %35, %cst_14 [0] : vector<16x128xi32> to vector<128xi32>
    %37 = vector.shape_cast %36 : vector<128xi32> to vector<1x128xi32>
    %38 = arith.addi %5, %37 : vector<1x128xi32>
    %c3_i32 = arith.constant 3 : i32
    %39 = vector.broadcast %c3_i32 : i32 to vector<16x128xi32>
    %40 = arith.cmpi eq, %13, %39 : vector<16x128xi32>
    %c0_i32_15 = arith.constant 0 : i32
    %41 = vector.broadcast %c0_i32_15 : i32 to vector<16x128xi32>
    %42 = arith.select %40, %17, %41 : vector<16x128xi1>, vector<16x128xi32>
    %cst_16 = arith.constant dense<0> : vector<128xi32>
    %43 = vector.multi_reduction <add>, %42, %cst_16 [0] : vector<16x128xi32> to vector<128xi32>
    %44 = vector.shape_cast %43 : vector<128xi32> to vector<1x128xi32>
    %45 = arith.addi %6, %44 : vector<1x128xi32>
    %c4_i32 = arith.constant 4 : i32
    %46 = vector.broadcast %c4_i32 : i32 to vector<16x128xi32>
    %47 = arith.cmpi eq, %13, %46 : vector<16x128xi32>
    %c0_i32_17 = arith.constant 0 : i32
    %48 = vector.broadcast %c0_i32_17 : i32 to vector<16x128xi32>
    %49 = arith.select %47, %17, %48 : vector<16x128xi1>, vector<16x128xi32>
    %cst_18 = arith.constant dense<0> : vector<128xi32>
    %50 = vector.multi_reduction <add>, %49, %cst_18 [0] : vector<16x128xi32> to vector<128xi32>
    %51 = vector.shape_cast %50 : vector<128xi32> to vector<1x128xi32>
    %52 = arith.addi %7, %51 : vector<1x128xi32>
    %c1_i32_19 = arith.constant 1 : i32
    %c0_20 = arith.constant 0 : index
    %c0_21 = arith.constant 0 : index
    %53 = vector.load %arg4[%c0_20, %c0_21] : memref<8x128xi32, #tpu.memory_space<vmem>>, vector<1x128xi32>
    %c65535_i32 = arith.constant 65535 : i32
    %54 = vector.broadcast %c65535_i32 : i32 to vector<1x128xi32>
    %55 = arith.andi %24, %54 : vector<1x128xi32>
    %56 = arith.addi %53, %55 : vector<1x128xi32>
    %c0_22 = arith.constant 0 : index
    %c0_23 = arith.constant 0 : index
    %57 = vector.load %arg4[%c0_22, %c0_23] : memref<8x128xi32, #tpu.memory_space<vmem>>, vector<1x128xi32>
    tpu.vector_store %arg4[%c0_22, %c0_23], %56 {strides = array<i32>} : memref<8x128xi32, #tpu.memory_space<vmem>>, vector<1x128xi32>,
    %c0_24 = arith.constant 0 : index
    %c0_25 = arith.constant 0 : index
    %58 = vector.load %arg5[%c0_24, %c0_25] : memref<8x128xi32, #tpu.memory_space<vmem>>, vector<1x128xi32>
    %c16_i32_26 = arith.constant 16 : i32
    %59 = vector.broadcast %c16_i32_26 : i32 to vector<1x128xi32>
    %60 = arith.shrsi %24, %59 : vector<1x128xi32>
    %61 = arith.addi %58, %60 : vector<1x128xi32>
    %c0_27 = arith.constant 0 : index
    %c0_28 = arith.constant 0 : index
    %62 = vector.load %arg5[%c0_27, %c0_28] : memref<8x128xi32, #tpu.memory_space<vmem>>, vector<1x128xi32>
    tpu.vector_store %arg5[%c0_27, %c0_28], %61 {strides = array<i32>} : memref<8x128xi32, #tpu.memory_space<vmem>>, vector<1x128xi32>,
    %c1 = arith.constant 1 : index
    %c0_29 = arith.constant 0 : index
    %63 = vector.load %arg4[%c1, %c0_29] : memref<8x128xi32, #tpu.memory_space<vmem>>, vector<1x128xi32>
    %c65535_i32_30 = arith.constant 65535 : i32
    %64 = vector.broadcast %c65535_i32_30 : i32 to vector<1x128xi32>
    %65 = arith.andi %31, %64 : vector<1x128xi32>
    %66 = arith.addi %63, %65 : vector<1x128xi32>
    %c1_31 = arith.constant 1 : index
    %c0_32 = arith.constant 0 : index
    %67 = vector.load %arg4[%c1_31, %c0_32] : memref<8x128xi32, #tpu.memory_space<vmem>>, vector<1x128xi32>
    tpu.vector_store %arg4[%c1_31, %c0_32], %66 {strides = array<i32>} : memref<8x128xi32, #tpu.memory_space<vmem>>, vector<1x128xi32>,
    %c1_33 = arith.constant 1 : index
    %c0_34 = arith.constant 0 : index
    %68 = vector.load %arg5[%c1_33, %c0_34] : memref<8x128xi32, #tpu.memory_space<vmem>>, vector<1x128xi32>
    %c16_i32_35 = arith.constant 16 : i32
    %69 = vector.broadcast %c16_i32_35 : i32 to vector<1x128xi32>
    %70 = arith.shrsi %31, %69 : vector<1x128xi32>
    %71 = arith.addi %68, %70 : vector<1x128xi32>
    %c1_36 = arith.constant 1 : index
    %c0_37 = arith.constant 0 : index
    %72 = vector.load %arg5[%c1_36, %c0_37] : memref<8x128xi32, #tpu.memory_space<vmem>>, vector<1x128xi32>
    tpu.vector_store %arg5[%c1_36, %c0_37], %71 {strides = array<i32>} : memref<8x128xi32, #tpu.memory_space<vmem>>, vector<1x128xi32>,
    %c2 = arith.constant 2 : index
    %c0_38 = arith.constant 0 : index
    %73 = vector.load %arg4[%c2, %c0_38] : memref<8x128xi32, #tpu.memory_space<vmem>>, vector<1x128xi32>
    %c65535_i32_39 = arith.constant 65535 : i32
    %74 = vector.broadcast %c65535_i32_39 : i32 to vector<1x128xi32>
    %75 = arith.andi %38, %74 : vector<1x128xi32>
    %76 = arith.addi %73, %75 : vector<1x128xi32>
    %c2_40 = arith.constant 2 : index
    %c0_41 = arith.constant 0 : index
    %77 = vector.load %arg4[%c2_40, %c0_41] : memref<8x128xi32, #tpu.memory_space<vmem>>, vector<1x128xi32>
    tpu.vector_store %arg4[%c2_40, %c0_41], %76 {strides = array<i32>} : memref<8x128xi32, #tpu.memory_space<vmem>>, vector<1x128xi32>,
    %c2_42 = arith.constant 2 : index
    %c0_43 = arith.constant 0 : index
    %78 = vector.load %arg5[%c2_42, %c0_43] : memref<8x128xi32, #tpu.memory_space<vmem>>, vector<1x128xi32>
    %c16_i32_44 = arith.constant 16 : i32
    %79 = vector.broadcast %c16_i32_44 : i32 to vector<1x128xi32>
    %80 = arith.shrsi %38, %79 : vector<1x128xi32>
    %81 = arith.addi %78, %80 : vector<1x128xi32>
    %c2_45 = arith.constant 2 : index
    %c0_46 = arith.constant 0 : index
    %82 = vector.load %arg5[%c2_45, %c0_46] : memref<8x128xi32, #tpu.memory_space<vmem>>, vector<1x128xi32>
    tpu.vector_store %arg5[%c2_45, %c0_46], %81 {strides = array<i32>} : memref<8x128xi32, #tpu.memory_space<vmem>>, vector<1x128xi32>,
    %c3 = arith.constant 3 : index
    %c0_47 = arith.constant 0 : index
    %83 = vector.load %arg4[%c3, %c0_47] : memref<8x128xi32, #tpu.memory_space<vmem>>, vector<1x128xi32>
    %c65535_i32_48 = arith.constant 65535 : i32
    %84 = vector.broadcast %c65535_i32_48 : i32 to vector<1x128xi32>
    %85 = arith.andi %45, %84 : vector<1x128xi32>
    %86 = arith.addi %83, %85 : vector<1x128xi32>
    %c3_49 = arith.constant 3 : index
    %c0_50 = arith.constant 0 : index
    %87 = vector.load %arg4[%c3_49, %c0_50] : memref<8x128xi32, #tpu.memory_space<vmem>>, vector<1x128xi32>
    tpu.vector_store %arg4[%c3_49, %c0_50], %86 {strides = array<i32>} : memref<8x128xi32, #tpu.memory_space<vmem>>, vector<1x128xi32>,
    %c3_51 = arith.constant 3 : index
    %c0_52 = arith.constant 0 : index
    %88 = vector.load %arg5[%c3_51, %c0_52] : memref<8x128xi32, #tpu.memory_space<vmem>>, vector<1x128xi32>
    %c16_i32_53 = arith.constant 16 : i32
    %89 = vector.broadcast %c16_i32_53 : i32 to vector<1x128xi32>
    %90 = arith.shrsi %45, %89 : vector<1x128xi32>
    %91 = arith.addi %88, %90 : vector<1x128xi32>
    %c3_54 = arith.constant 3 : index
    %c0_55 = arith.constant 0 : index
    %92 = vector.load %arg5[%c3_54, %c0_55] : memref<8x128xi32, #tpu.memory_space<vmem>>, vector<1x128xi32>
    tpu.vector_store %arg5[%c3_54, %c0_55], %91 {strides = array<i32>} : memref<8x128xi32, #tpu.memory_space<vmem>>, vector<1x128xi32>,
    %c4 = arith.constant 4 : index
    %c0_56 = arith.constant 0 : index
    %93 = vector.load %arg4[%c4, %c0_56] : memref<8x128xi32, #tpu.memory_space<vmem>>, vector<1x128xi32>
    %c65535_i32_57 = arith.constant 65535 : i32
    %94 = vector.broadcast %c65535_i32_57 : i32 to vector<1x128xi32>
    %95 = arith.andi %52, %94 : vector<1x128xi32>
    %96 = arith.addi %93, %95 : vector<1x128xi32>
    %c4_58 = arith.constant 4 : index
    %c0_59 = arith.constant 0 : index
    %97 = vector.load %arg4[%c4_58, %c0_59] : memref<8x128xi32, #tpu.memory_space<vmem>>, vector<1x128xi32>
    tpu.vector_store %arg4[%c4_58, %c0_59], %96 {strides = array<i32>} : memref<8x128xi32, #tpu.memory_space<vmem>>, vector<1x128xi32>,
    %c4_60 = arith.constant 4 : index
    %c0_61 = arith.constant 0 : index
    %98 = vector.load %arg5[%c4_60, %c0_61] : memref<8x128xi32, #tpu.memory_space<vmem>>, vector<1x128xi32>
    %c16_i32_62 = arith.constant 16 : i32
    %99 = vector.broadcast %c16_i32_62 : i32 to vector<1x128xi32>
    %100 = arith.shrsi %52, %99 : vector<1x128xi32>
    %101 = arith.addi %98, %100 : vector<1x128xi32>
    %c4_63 = arith.constant 4 : index
    %c0_64 = arith.constant 0 : index
    %102 = vector.load %arg5[%c4_63, %c0_64] : memref<8x128xi32, #tpu.memory_space<vmem>>, vector<1x128xi32>
    tpu.vector_store %arg5[%c4_63, %c0_64], %101 {strides = array<i32>} : memref<8x128xi32, #tpu.memory_space<vmem>>, vector<1x128xi32>,
    return
  }
  func.func @transform_0(%arg0: i32, %arg1: i32) -> (i32, i32) {
    %c1_i32 = arith.constant 1 : i32
    %0 = arith.muli %arg0, %c1_i32 : i32
    %1 = arith.addi %0, %arg1 : i32
    %c0_i32 = arith.constant 0 : i32
    %2 = arith.minsi %1, %c0_i32 : i32
    %c0_i32_0 = arith.constant 0 : i32
    %c0_i32_1 = arith.constant 0 : i32
    return %2, %c0_i32_0 : i32, i32
  }
  func.func @transform_1(%arg0: i32, %arg1: i32) -> (i32, i32) {
    %c1_i32 = arith.constant 1 : i32
    %0 = arith.muli %arg0, %c1_i32 : i32
    %1 = arith.addi %0, %arg1 : i32
    %c0_i32 = arith.constant 0 : i32
    %2 = arith.minsi %1, %c0_i32 : i32
    %c0_i32_0 = arith.constant 0 : i32
    %c0_i32_1 = arith.constant 0 : i32
    return %2, %c0_i32_0 : i32, i32
  }
  func.func @transform_2(%arg0: i32, %arg1: i32) -> (i32, i32) {
    %c0_i32 = arith.constant 0 : i32
    %c0_i32_0 = arith.constant 0 : i32
    return %arg0, %c0_i32 : i32, i32
  }
  func.func @transform_3(%arg0: i32, %arg1: i32) -> (i32, i32) {
    %c0_i32 = arith.constant 0 : i32
    %c0_i32_0 = arith.constant 0 : i32
    return %arg0, %c0_i32 : i32, i32
  }
}

</mosaic_0001>

<llo_original>
// kernel: get_sensitivities.1
$region0: #{get_sensitivities.1}
  #allocation0 [shape = 'u32[]', space=smem, size = 0x4, offset = 0x4, fixed_abs, tag = 'smem constant byte address 0x4 - core index']
  #allocation1 [shape = 'u32[144,128]{1,0:T(1,128)}', space=vmem, size = 0x12000, scoped, tag = 'internal scratch']
  %s0 = inlined_call_operand.vmem [shape: s32[16,128], index: 0, kind: input, shape index: {}]
  %s1 = inlined_call_operand.vmem [shape: s32[16,128], index: 1, kind: input, shape index: {}]
  %s2 = inlined_call_operand.vmem [shape: s32[8,128], index: 2, kind: output, shape index: {0}]
  %s3 = inlined_call_operand.vmem [shape: s32[8,128], index: 3, kind: output, shape index: {1}]
  %4 = xla_tuple %s2, %s3
  %s5 = sld [smem:[#allocation0]]
  $region30: #{get_sensitivities.1} parent=0
    _
  %s7 = ssub.s32 1, %s5
  %s8 = scalar_select 0, %s7, %s5
  // Predicated region
  $region2: #{get_sensitivities.1} parent=0 // pred_check
    _
  $region3: #{get_sensitivities.1} parent=0 // pred_check_branch
    %10 = sbr.rel (0) target = $region5
  $region4: #{get_sensitivities.1} parent=0 // pred_region
    %s11 = sadd.s32 0, 0
    %p12 = scmp.lt.s32.totalorder %s11, 0
    %s13 = scalar_select %p12, %s11, 0
    %s14 = smul.u32 2, %s13
    %p15 = scmp.lt.s32.totalorder %s14, 1
    %s16 = scalar_select %p15, %s14, 1
    %s17 = smul.addr %s16, 8
    %s18 = scalar_lea.vmem %s0, %s17
    %s19 = sadd.s32 0, 0
    %p20 = scmp.lt.s32.totalorder %s19, 0
    %s21 = scalar_select %p20, %s19, 0
    %s22 = smul.u32 2, %s21
  $region5: #{get_sensitivities.1} parent=0 // pred_fallthru
    _
  // Predicated region
  $region6: #{get_sensitivities.1} parent=0 // pred_check
    _
  $region7: #{get_sensitivities.1} parent=0 // pred_check_branch
    %24 = sbr.rel (0) target = $region9
  $region8: #{get_sensitivities.1} parent=0 // pred_region
    %s25 = sadd.s32 0, 0
    %p26 = scmp.lt.s32.totalorder %s25, 0
    %s27 = scalar_select %p26, %s25, 0
    %s28 = smul.u32 2, %s27
    %p29 = scmp.lt.s32.totalorder %s28, 1
    %s30 = scalar_select %p29, %s28, 1
    %s31 = smul.addr %s30, 8
    %s32 = scalar_lea.vmem %s1, %s31
    %s33 = sadd.s32 0, 0
    %p34 = scmp.lt.s32.totalorder %s33, 0
    %s35 = scalar_select %p34, %s33, 0
    %s36 = smul.u32 2, %s35
  $region9: #{get_sensitivities.1} parent=0 // pred_fallthru
    _
  %s37 = sadd.s32 0, 0
  %p38 = scmp.lt.s32.totalorder %s37, 0
  %s39 = scalar_select %p38, %s37, 0
  %s40 = smul.u32 2, %s39
  %p41 = scmp.lt.s32.totalorder %s40, 1
  %s42 = scalar_select %p41, %s40, 1
  %s43 = smul.addr %s42, 8
  %s44 = scalar_lea.vmem %s0, %s43
  %s45 = sadd.s32 0, 0
  %p46 = scmp.lt.s32.totalorder %s45, 0
  %s47 = scalar_select %p46, %s45, 0
  %s48 = smul.u32 2, %s47
  %p49 = scmp.lt.s32.totalorder %s48, 1
  %s50 = scalar_select %p49, %s48, 1
  %s51 = smul.addr %s50, 8
  %s52 = scalar_lea.vmem %s1, %s51
  %s53 = sadd.s32 0, 0
  %p54 = scmp.lt.s32.totalorder %s53, 0
  %s55 = scalar_select %p54, %s53, 0
  %s56 = smul.u32 2, %s55
  %p57 = scmp.lt.s32.totalorder %s56, 1
  %s58 = scalar_select %p57, %s56, 1
  %s59 = smul.addr %s58, 8
  %s60 = scalar_lea.vmem %s0, %s59
  %s61 = sadd.s32 0, 0
  %p62 = scmp.lt.s32.totalorder %s61, 0
  %s63 = scalar_select %p62, %s61, 0
  %s64 = smul.u32 2, %s63
  %s65 = sadd.s32 0, 0
  %p66 = scmp.lt.s32.totalorder %s65, 0
  %s67 = scalar_select %p66, %s65, 0
  %s68 = smul.u32 2, %s67
  %p69 = scmp.lt.s32.totalorder %s68, 1
  %s70 = scalar_select %p69, %s68, 1
  %s71 = smul.addr %s70, 8
  %s72 = scalar_lea.vmem %s1, %s71
  %s73 = sadd.s32 0, 0
  %p74 = scmp.lt.s32.totalorder %s73, 0
  %s75 = scalar_select %p74, %s73, 0
  %s76 = smul.u32 2, %s75
  %p77 = scmp.eq.s32.totalorder 0, 0
  // Predicated region
  $region10: #{get_sensitivities.1} parent=0 // pred_check
    %p78 = pneg %p77
  $region11: #{get_sensitivities.1} parent=0 // pred_check_branch
    %80 = sbr.rel (%p78) target = $region13
  $region12: #{get_sensitivities.1} parent=0 // pred_region
    %81 = vst [vmem:[%s2] sm:$0xff] 0
    %82 = vst [vmem:[%s3] sm:$0xff] 0
  $region13: #{get_sensitivities.1} parent=0 // pred_fallthru
    _
  %v83 = vld [vmem:[%s60] sm:$0xff]
  %v84 = vld [vmem:[%s60 + $0x8] sm:$0xff]
  %v85 = vld [vmem:[%s72] sm:$0xff]
  %v86 = vld [vmem:[%s72 + $0x8] sm:$0xff]
  %vm87 = vcmp.eq.s32.totalorder %v83, %v85
  %vm88 = vcmp.eq.s32.totalorder %v84, %v86
  %v89 = vsel %vm87, 65537, 1
  %v90 = vsel %vm88, 65537, 1
  %vm91 = vcmp.eq.s32.totalorder %v85, 0
  %vm92 = vcmp.eq.s32.totalorder %v86, 0
  %v93 = vsel %vm91, %v89, 0
  %v94 = vsel %vm92, %v90, 0
  %v95 = vadd.s32 %v93, %v94
  %v96 = vrot.slane %v95, 4
  %v97 = vadd.s32 %v95, %v96
  %v98 = vrot.slane %v97, 2
  %v99 = vadd.s32 %v97, %v98
  %v100 = vrot.slane %v99, 1
  %v101 = vadd.s32 %v99, %v100
  %vm102 = vcmp.eq.s32.totalorder %v85, 1
  %vm103 = vcmp.eq.s32.totalorder %v86, 1
  %v104 = vsel %vm102, %v89, 0
  %v105 = vsel %vm103, %v90, 0
  %v106 = vadd.s32 %v104, %v105
  %v107 = vrot.slane %v106, 4
  %v108 = vadd.s32 %v106, %v107
  %v109 = vrot.slane %v108, 2
  %v110 = vadd.s32 %v108, %v109
  %v111 = vrot.slane %v110, 1
  %v112 = vadd.s32 %v110, %v111
  %vm113 = vcmp.eq.s32.totalorder %v85, 2
  %vm114 = vcmp.eq.s32.totalorder %v86, 2
  %v115 = vsel %vm113, %v89, 0
  %v116 = vsel %vm114, %v90, 0
  %v117 = vadd.s32 %v115, %v116
  %v118 = vrot.slane %v117, 4
  %v119 = vadd.s32 %v117, %v118
  %v120 = vrot.slane %v119, 2
  %v121 = vadd.s32 %v119, %v120
  %v122 = vrot.slane %v121, 1
  %v123 = vadd.s32 %v121, %v122
  %vm124 = vcmp.eq.s32.totalorder %v85, 3
  %vm125 = vcmp.eq.s32.totalorder %v86, 3
  %v126 = vsel %vm124, %v89, 0
  %v127 = vsel %vm125, %v90, 0
  %v128 = vadd.s32 %v126, %v127
  %v129 = vrot.slane %v128, 4
  %v130 = vadd.s32 %v128, %v129
  %v131 = vrot.slane %v130, 2
  %v132 = vadd.s32 %v130, %v131
  %v133 = vrot.slane %v132, 1
  %v134 = vadd.s32 %v132, %v133
  %vm135 = vcmp.eq.s32.totalorder %v85, 4
  %vm136 = vcmp.eq.s32.totalorder %v86, 4
  %v137 = vsel %vm135, %v89, 0
  %v138 = vsel %vm136, %v90, 0
  %v139 = vadd.s32 %v137, %v138
  %v140 = vrot.slane %v139, 4
  %v141 = vadd.s32 %v139, %v140
  %v142 = vrot.slane %v141, 2
  %v143 = vadd.s32 %v141, %v142
  %v144 = vrot.slane %v143, 1
  %v145 = vadd.s32 %v143, %v144
  %v146 = vld [vmem:[%s2] sm:$0x1]
  %v147 = vand.u32 %v101, 65535
  %v148 = vadd.s32 %v146, %v147
  %149 = vst [vmem:[%s2] sm:$0x1] %v148
  %v150 = vld [vmem:[%s3] sm:$0x1]
  %v151 = vshra.s32 %v101, 16
  %v152 = vadd.s32 %v150, %v151
  %153 = vst [vmem:[%s3] sm:$0x1] %v152
  %v154 = vld [vmem:[%s2 + $0x1] sm:$0x1]
  %v155 = vand.u32 %v112, 65535
  %v156 = vadd.s32 %v154, %v155
  %157 = vst [vmem:[%s2 + $0x1] sm:$0x1] %v156
  %v158 = vld [vmem:[%s3 + $0x1] sm:$0x1]
  %v159 = vshra.s32 %v112, 16
  %v160 = vadd.s32 %v158, %v159
  %161 = vst [vmem:[%s3 + $0x1] sm:$0x1] %v160
  %v162 = vld [vmem:[%s2 + $0x2] sm:$0x1]
  %v163 = vand.u32 %v123, 65535
  %v164 = vadd.s32 %v162, %v163
  %165 = vst [vmem:[%s2 + $0x2] sm:$0x1] %v164
  %v166 = vld [vmem:[%s3 + $0x2] sm:$0x1]
  %v167 = vshra.s32 %v123, 16
  %v168 = vadd.s32 %v166, %v167
  %169 = vst [vmem:[%s3 + $0x2] sm:$0x1] %v168
  %v170 = vld [vmem:[%s2 + $0x3] sm:$0x1]
  %v171 = vand.u32 %v134, 65535
  %v172 = vadd.s32 %v170, %v171
  %173 = vst [vmem:[%s2 + $0x3] sm:$0x1] %v172
  %v174 = vld [vmem:[%s3 + $0x3] sm:$0x1]
  %v175 = vshra.s32 %v134, 16
  %v176 = vadd.s32 %v174, %v175
  %177 = vst [vmem:[%s3 + $0x3] sm:$0x1] %v176
  %v178 = vld [vmem:[%s2 + $0x4] sm:$0x1]
  %v179 = vand.u32 %v145, 65535
  %v180 = vadd.s32 %v178, %v179
  %181 = vst [vmem:[%s2 + $0x4] sm:$0x1] %v180
  %v182 = vld [vmem:[%s3 + $0x4] sm:$0x1]
  %v183 = vshra.s32 %v145, 16
  %v184 = vadd.s32 %v182, %v183
  %185 = vst [vmem:[%s3 + $0x4] sm:$0x1] %v184
  // Predicated region
  $region14: #{get_sensitivities.1} parent=0 // pred_check
    _
  $region15: #{get_sensitivities.1} parent=0 // pred_check_branch
    %187 = sbr.rel (0) target = $region17
  $region16: #{get_sensitivities.1} parent=0 // pred_region
    _
  $region17: #{get_sensitivities.1} parent=0 // pred_fallthru
    _
  // Predicated region
  $region18: #{get_sensitivities.1} parent=0 // pred_check
    _
  $region19: #{get_sensitivities.1} parent=0 // pred_check_branch
    %189 = sbr.rel (0) target = $region21
  $region20: #{get_sensitivities.1} parent=0 // pred_region
    _
  $region21: #{get_sensitivities.1} parent=0 // pred_fallthru
    _
  // Predicated region
  $region22: #{get_sensitivities.1} parent=0 // pred_check
    _
  $region23: #{get_sensitivities.1} parent=0 // pred_check_branch
    %191 = sbr.rel (0) target = $region25
  $region24: #{get_sensitivities.1} parent=0 // pred_region
    _
  $region25: #{get_sensitivities.1} parent=0 // pred_fallthru
    _
  // Predicated region
  $region26: #{get_sensitivities.1} parent=0 // pred_check
    _
  $region27: #{get_sensitivities.1} parent=0 // pred_check_branch
    %193 = sbr.rel (0) target = $region29
  $region28: #{get_sensitivities.1} parent=0 // pred_region
    _
  $region29: #{get_sensitivities.1} parent=0 // pred_fallthru
    _

</llo_original>
